<compile_context>
chip_gen: v7x
topology: tpu7x:2x2x1
jax: 0.10.0
libtpu: 0.0.40
codegen_flags: <defaults>
</compile_context>

<pallas_src>
import functools

import jax
import jax.numpy as jnp
from jax.experimental import pallas as pl
from jax.experimental.pallas import tpu as pltpu

MIN_LOG_STD = -20.0
MAX_LOG_STD = 2.0
HIDDEN = 256


def _round_up(x, m):
    return ((x + m - 1) // m) * m


def _policy_kernel(x_ref,
                   w1_ref, b1_ref,
                   w2_ref, b2_ref,
                   wh_ref, bh_ref,
                   out_ref,
                   *, n_action, ls_lo, ls_hi):
    x = x_ref[...]

    # fc1 + relu  (matmul in weight dtype, f32 accumulate, f32 elementwise)
    w1 = w1_ref[...]
    h1 = jnp.dot(x.astype(w1.dtype), w1, preferred_element_type=jnp.float32)
    h1 = jnp.maximum(h1 + b1_ref[...], 0.0)

    # fc2 + relu
    w2 = w2_ref[...]
    h2 = jnp.dot(h1.astype(w2.dtype), w2, preferred_element_type=jnp.float32)
    h2 = jnp.maximum(h2 + b2_ref[...], 0.0)

    # Fused heads: [mu | log_std] in one MXU push.
    wh = wh_ref[...]
    head = jnp.dot(h2.astype(wh.dtype), wh, preferred_element_type=jnp.float32)
    head = head + bh_ref[...]

    # log_std lanes (col >= n_action): relu-then-clamp folded into one clip
    # with lower bound max(0, min_log_std); mu lanes pass through untouched.
    col = jax.lax.broadcasted_iota(jnp.int32, head.shape, 1)
    clamped = jnp.clip(head, ls_lo, ls_hi)
    out_ref[...] = jnp.where(col >= n_action, clamped, head).astype(out_ref.dtype)


def policy_network_forward(state, params,
                           min_log_std=MIN_LOG_STD, max_log_std=MAX_LOG_STD):
    """Pallas forward pass. state: [B, n_state] float32 -> (mu, log_std)."""
    B, n_state = state.shape
    hidden = params["w1"].shape[1]
    two_na = params["whead"].shape[1]
    n_action = two_na // 2

    # Batch tile: multiple of 8 (f32 sublanes), capped at 512 (per-step
    # overhead amortized, still tiny in VMEM next to the resident weights).
    TM = min(512, _round_up(B, 8))
    grid_b = pl.cdiv(B, TM)
    B_pad = grid_b * TM
    x = state if B_pad == B else jnp.pad(state, ((0, B_pad - B), (0, 0)))

    # relu(ls) then clamp(min,max)  ==  clip(ls, max(0, min), max)
    ls_lo = float(max(0.0, min_log_std))
    ls_hi = float(max_log_std)

    kernel = functools.partial(_policy_kernel,
                               n_action=n_action, ls_lo=ls_lo, ls_hi=ls_hi)

    def resident(shape):
        # Full-array block, constant index_map -> fetched once, stays in VMEM
        # across every batch grid step.
        return pl.BlockSpec(shape, lambda i: (0, 0))

    flops = 2 * B_pad * (n_state * hidden + hidden * hidden + hidden * two_na)
    bytes_accessed = int(
        x.size * x.dtype.itemsize
        + sum(p.size * p.dtype.itemsize for p in params.values())
        + B_pad * two_na * 4)

    out = pl.pallas_call(
        kernel,
        out_shape=jax.ShapeDtypeStruct((B_pad, two_na), jnp.float32),
        grid=(grid_b,),
        in_specs=[
            pl.BlockSpec((TM, n_state), lambda i: (i, 0)),   # state tile, pipelined
            resident(params["w1"].shape),
            resident(params["b1"].shape),
            resident(params["w2"].shape),
            resident(params["b2"].shape),
            resident(params["whead"].shape),
            resident(params["bhead"].shape),
        ],
        out_specs=pl.BlockSpec((TM, two_na), lambda i: (i, 0)),
        compiler_params=pltpu.CompilerParams(
            dimension_semantics=("parallel",)),
        cost_estimate=pl.CostEstimate(flops=flops, transcendentals=0,
                                      bytes_accessed=bytes_accessed),
    )(x,
      params["w1"], params["b1"],
      params["w2"], params["b2"],
      params["whead"], params["bhead"])

    mu = out[:B, :n_action]
    log_std = out[:B, n_action:]
    return mu, log_std


def init_params(key, n_state, n_action, hidden=HIDDEN, weight_dtype=jnp.float32):
    """PyTorch Linear default init (uniform +-1/sqrt(fan_in)); weights stored
    transposed [in, out]; the two heads are packed into one [hidden, 2*n_action]
    weight. Set weight_dtype=jnp.bfloat16 for the MXU/DMA win on v6e/v7x
    (biases / elementwise math stay f32)."""
    ks = jax.random.split(key, 8)

    def lin(kw, kb, fan_in, fan_out):
        bound = 1.0 / jnp.sqrt(jnp.float32(fan_in))
        w = jax.random.uniform(kw, (fan_in, fan_out), jnp.float32, -bound, bound)
        b = jax.random.uniform(kb, (1, fan_out), jnp.float32, -bound, bound)
        return w, b

    w1, b1 = lin(ks[0], ks[1], n_state, hidden)
    w2, b2 = lin(ks[2], ks[3], hidden, hidden)
    wmu, bmu = lin(ks[4], ks[5], hidden, n_action)
    wls, bls = lin(ks[6], ks[7], hidden, n_action)
    whead = jnp.concatenate([wmu, wls], axis=1)   # [hidden, 2*n_action]
    bhead = jnp.concatenate([bmu, bls], axis=1)   # [1, 2*n_action]
    return dict(w1=w1.astype(weight_dtype), b1=b1,
                w2=w2.astype(weight_dtype), b2=b2,
                whead=whead.astype(weight_dtype), bhead=bhead)


def _reference_forward(state, params,
                       min_log_std=MIN_LOG_STD, max_log_std=MAX_LOG_STD):
    """Pure-JAX reference mirroring the PyTorch forward (ReLU then clamp)."""
    w1 = params["w1"].astype(jnp.float32)
    w2 = params["w2"].astype(jnp.float32)
    wh = params["whead"].astype(jnp.float32)
    n_action = wh.shape[1] // 2
    h1 = jnp.maximum(state @ w1 + params["b1"], 0.0)
    h2 = jnp.maximum(h1 @ w2 + params["b2"], 0.0)
    head = h2 @ wh + params["bhead"]
    mu = head[:, :n_action]
    ls = jnp.clip(jnp.maximum(head[:, n_action:], 0.0), min_log_std, max_log_std)
    return mu, ls


if __name__ == "__main__":
    key = jax.random.PRNGKey(0)
    k_params, k_state, k_big, k_huge = jax.random.split(key, 4)

    n_state, n_action, batch = 8, 4, 2
    params = init_params(k_params, n_state, n_action)

    # Small batch (single padded tile).
    state = jax.random.normal(k_state, (batch, n_state), jnp.float32)
    mu, log_std = policy_network_forward(state, params)
    jax.block_until_ready((mu, log_std))
    mu_ref, ls_ref = _reference_forward(state, params)
    assert mu.shape == (batch, n_action) and log_std.shape == (batch, n_action)
    assert jnp.allclose(mu, mu_ref, atol=1e-5, rtol=1e-5)
    assert jnp.allclose(log_std, ls_ref, atol=1e-5, rtol=1e-5)

    # Larger, non-divisible batch: exercises padding (single tile, TM=304).
    big_b = 300
    state_big = jax.random.normal(k_big, (big_b, n_state), jnp.float32)
    mu_b, ls_b = policy_network_forward(state_big, params)
    jax.block_until_ready((mu_b, ls_b))
    mu_br, ls_br = _reference_forward(state_big, params)
    assert mu_b.shape == (big_b, n_action) and ls_b.shape == (big_b, n_action)
    assert jnp.allclose(mu_b, mu_br, atol=1e-4, rtol=1e-4)
    assert jnp.allclose(ls_b, ls_br, atol=1e-4, rtol=1e-4)

    # Multi-tile batch: exercises the pipelined batch grid (TM=512, grid=3).
    huge_b = 1300
    state_huge = jax.random.normal(k_huge, (huge_b, n_state), jnp.float32)
    mu_h, ls_h = policy_network_forward(state_huge, params)
    jax.block_until_ready((mu_h, ls_h))
    mu_hr, ls_hr = _reference_forward(state_huge, params)
    assert mu_h.shape == (huge_b, n_action) and ls_h.shape == (huge_b, n_action)
    assert jnp.allclose(mu_h, mu_hr, atol=1e-4, rtol=1e-4)
    assert jnp.allclose(ls_h, ls_hr, atol=1e-4, rtol=1e-4)

    print("KERNEL_OK")
</pallas_src>

<mosaic_0001>
module attributes {stable_mosaic.version = 11 : i64} {
  func.func @_policy_kernel(%arg0: i32, %arg1: memref<8x8xf32, #tpu.memory_space<vmem>>, %arg2: memref<8x256xf32, #tpu.memory_space<vmem>>, %arg3: memref<1x256xf32, #tpu.memory_space<vmem>>, %arg4: memref<256x256xf32, #tpu.memory_space<vmem>>, %arg5: memref<1x256xf32, #tpu.memory_space<vmem>>, %arg6: memref<256x8xf32, #tpu.memory_space<vmem>>, %arg7: memref<1x8xf32, #tpu.memory_space<vmem>>, %arg8: memref<8x8xf32, #tpu.memory_space<vmem>>) attributes {dimension_semantics = [#tpu.dimension_semantics<parallel>], iteration_bounds = array<i64: 1>, scalar_prefetch = 0 : i64, scratch_operands = 0 : i64, tpu.core_type = #tpu.core_type<tc>, window_params = [{transform_indices = @transform_0, window_bounds = array<i64: 8, 8>}, {pipeline_mode = #tpu.pipeline_mode<synchronous>, transform_indices = @transform_1, window_bounds = array<i64: 8, 256>}, {pipeline_mode = #tpu.pipeline_mode<synchronous>, transform_indices = @transform_2, window_bounds = array<i64: 1, 256>}, {pipeline_mode = #tpu.pipeline_mode<synchronous>, transform_indices = @transform_3, window_bounds = array<i64: 256, 256>}, {pipeline_mode = #tpu.pipeline_mode<synchronous>, transform_indices = @transform_4, window_bounds = array<i64: 1, 256>}, {pipeline_mode = #tpu.pipeline_mode<synchronous>, transform_indices = @transform_5, window_bounds = array<i64: 256, 8>}, {pipeline_mode = #tpu.pipeline_mode<synchronous>, transform_indices = @transform_6, window_bounds = array<i64: 1, 8>}, {transform_indices = @transform_7, window_bounds = array<i64: 8, 8>}]} {
    %c0 = arith.constant 0 : index
    %c0_0 = arith.constant 0 : index
    %0 = vector.load %arg1[%c0, %c0_0] : memref<8x8xf32, #tpu.memory_space<vmem>>, vector<8x8xf32>
    %c0_1 = arith.constant 0 : index
    %c0_2 = arith.constant 0 : index
    %1 = vector.load %arg2[%c0_1, %c0_2] : memref<8x256xf32, #tpu.memory_space<vmem>>, vector<8x256xf32>
    %cst = arith.constant dense<0.000000e+00> : vector<8x256xf32>
    %2 = tpu.matmul %0, %1, %cst {dimension_numbers = #tpu.dot_dimension_numbers<[1], [0], [0], [1], [0, 0, 1, 1], [], []>} : vector<8x8xf32>, vector<8x256xf32>, vector<8x256xf32> -> vector<8x256xf32>
    %c0_3 = arith.constant 0 : index
    %c0_4 = arith.constant 0 : index
    %3 = vector.load %arg3[%c0_3, %c0_4] : memref<1x256xf32, #tpu.memory_space<vmem>>, vector<1x256xf32>
    %4 = vector.broadcast %3 : vector<1x256xf32> to vector<8x256xf32>
    %5 = arith.addf %2, %4 : vector<8x256xf32>
    %cst_5 = arith.constant 0.000000e+00 : f32
    %6 = vector.broadcast %cst_5 : f32 to vector<8x256xf32>
    %7 = arith.maximumf %5, %6 : vector<8x256xf32>
    %c0_6 = arith.constant 0 : index
    %c0_7 = arith.constant 0 : index
    %8 = vector.load %arg4[%c0_6, %c0_7] : memref<256x256xf32, #tpu.memory_space<vmem>>, vector<256x256xf32>
    %cst_8 = arith.constant dense<0.000000e+00> : vector<8x256xf32>
    %9 = tpu.matmul %7, %8, %cst_8 {dimension_numbers = #tpu.dot_dimension_numbers<[1], [0], [0], [1], [0, 0, 1, 1], [], []>} : vector<8x256xf32>, vector<256x256xf32>, vector<8x256xf32> -> vector<8x256xf32>
    %c0_9 = arith.constant 0 : index
    %c0_10 = arith.constant 0 : index
    %10 = vector.load %arg5[%c0_9, %c0_10] : memref<1x256xf32, #tpu.memory_space<vmem>>, vector<1x256xf32>
    %11 = vector.broadcast %10 : vector<1x256xf32> to vector<8x256xf32>
    %12 = arith.addf %9, %11 : vector<8x256xf32>
    %cst_11 = arith.constant 0.000000e+00 : f32
    %13 = vector.broadcast %cst_11 : f32 to vector<8x256xf32>
    %14 = arith.maximumf %12, %13 : vector<8x256xf32>
    %c0_12 = arith.constant 0 : index
    %c0_13 = arith.constant 0 : index
    %15 = vector.load %arg6[%c0_12, %c0_13] : memref<256x8xf32, #tpu.memory_space<vmem>>, vector<256x8xf32>
    %cst_14 = arith.constant dense<0.000000e+00> : vector<8x8xf32>
    %16 = tpu.matmul %14, %15, %cst_14 {dimension_numbers = #tpu.dot_dimension_numbers<[1], [0], [0], [1], [0, 0, 1, 1], [], []>} : vector<8x256xf32>, vector<256x8xf32>, vector<8x8xf32> -> vector<8x8xf32>
    %c0_15 = arith.constant 0 : index
    %c0_16 = arith.constant 0 : index
    %17 = vector.load %arg7[%c0_15, %c0_16] : memref<1x8xf32, #tpu.memory_space<vmem>>, vector<1x8xf32>
    %18 = vector.broadcast %17 : vector<1x8xf32> to vector<8x8xf32>
    %19 = arith.addf %16, %18 : vector<8x8xf32>
    %20 = tpu.iota {dimensions = array<i32: 1>} : vector<8x8xi32>
    %cst_17 = arith.constant 0.000000e+00 : f32
    %cst_18 = arith.constant 2.000000e+00 : f32
    %21 = vector.broadcast %cst_17 : f32 to vector<8x8xf32>
    %22 = arith.maximumf %21, %19 : vector<8x8xf32>
    %23 = vector.broadcast %cst_18 : f32 to vector<8x8xf32>
    %24 = arith.minimumf %23, %22 : vector<8x8xf32>
    %c4_i32 = arith.constant 4 : i32
    %25 = vector.broadcast %c4_i32 : i32 to vector<8x8xi32>
    %26 = arith.cmpi sge, %20, %25 : vector<8x8xi32>
    %27 = arith.select %26, %24, %19 : vector<8x8xi1>, vector<8x8xf32>
    %c0_19 = arith.constant 0 : index
    %c0_20 = arith.constant 0 : index
    %28 = vector.load %arg8[%c0_19, %c0_20] : memref<8x8xf32, #tpu.memory_space<vmem>>, vector<8x8xf32>
    tpu.vector_store %arg8[%c0_19, %c0_20], %27 {strides = array<i32>} : memref<8x8xf32, #tpu.memory_space<vmem>>, vector<8x8xf32>,
    return
  }
  func.func @transform_0(%arg0: i32) -> (i32, i32) {
    %c0_i32 = arith.constant 0 : i32
    %c0_i32_0 = arith.constant 0 : i32
    return %arg0, %c0_i32 : i32, i32
  }
  func.func @transform_1(%arg0: i32) -> (i32, i32) {
    %c0_i32 = arith.constant 0 : i32
    %c0_i32_0 = arith.constant 0 : i32
    %c0_i32_1 = arith.constant 0 : i32
    return %c0_i32, %c0_i32_0 : i32, i32
  }
  func.func @transform_2(%arg0: i32) -> (i32, i32) {
    %c0_i32 = arith.constant 0 : i32
    %c0_i32_0 = arith.constant 0 : i32
    %c0_i32_1 = arith.constant 0 : i32
    return %c0_i32, %c0_i32_0 : i32, i32
  }
  func.func @transform_3(%arg0: i32) -> (i32, i32) {
    %c0_i32 = arith.constant 0 : i32
    %c0_i32_0 = arith.constant 0 : i32
    %c0_i32_1 = arith.constant 0 : i32
    return %c0_i32, %c0_i32_0 : i32, i32
  }
  func.func @transform_4(%arg0: i32) -> (i32, i32) {
    %c0_i32 = arith.constant 0 : i32
    %c0_i32_0 = arith.constant 0 : i32
    %c0_i32_1 = arith.constant 0 : i32
    return %c0_i32, %c0_i32_0 : i32, i32
  }
  func.func @transform_5(%arg0: i32) -> (i32, i32) {
    %c0_i32 = arith.constant 0 : i32
    %c0_i32_0 = arith.constant 0 : i32
    %c0_i32_1 = arith.constant 0 : i32
    return %c0_i32, %c0_i32_0 : i32, i32
  }
  func.func @transform_6(%arg0: i32) -> (i32, i32) {
    %c0_i32 = arith.constant 0 : i32
    %c0_i32_0 = arith.constant 0 : i32
    %c0_i32_1 = arith.constant 0 : i32
    return %c0_i32, %c0_i32_0 : i32, i32
  }
  func.func @transform_7(%arg0: i32) -> (i32, i32) {
    %c0_i32 = arith.constant 0 : i32
    %c0_i32_0 = arith.constant 0 : i32
    return %arg0, %c0_i32 : i32, i32
  }
}

</mosaic_0001>

<llo_original>
// kernel: tpu_custom_call.1
$region0: #{tpu_custom_call.1}
  #allocation0 [shape = 'u32[]', space=smem, size = 0x4, offset = 0x4, fixed_abs, tag = 'smem constant byte address 0x4 - core index']
  #allocation1 [shape = 'u32[144,128]{1,0:T(1,128)}', space=vmem, size = 0x12000, scoped, tag = 'internal scratch']
  %s0 = inlined_call_operand.vmem [shape: f32[8,8], index: 0, kind: input, shape index: {}]
  %s1 = inlined_call_operand.vmem [shape: f32[8,256], index: 1, kind: input, shape index: {}]
  %s2 = inlined_call_operand.vmem [shape: f32[1,256], index: 2, kind: input, shape index: {}]
  %s3 = inlined_call_operand.hbm [shape: f32[256,256], index: 3, kind: input, shape index: {}]
  %s4 = inlined_call_operand.vmem [shape: f32[1,256], index: 4, kind: input, shape index: {}]
  %s5 = inlined_call_operand.vmem [shape: f32[256,8], index: 5, kind: input, shape index: {}]
  %s6 = inlined_call_operand.vmem [shape: f32[1,8], index: 6, kind: input, shape index: {}]
  %s7 = inlined_call_operand.hbm [shape: f32[8,8], index: 7, kind: output, shape index: {}]
  %s8 = sld [smem:[#allocation0]]
  $region42: #{tpu_custom_call.1} parent=0
    _
  %s10 = ssub.s32 1, %s8
  %s11 = scalar_select 0, %s10, %s8
  $region1: #{tpu_custom_call.1} parent=0
    #allocation2 [shape = 'u8[262144]{0}', space=vmem, size = 0x40000, scoped, tag = 'input window, operand 3, single buffered']
    #allocation3 [shape = 's32[1]{0}', space=sflag, size = 0x4, scoped, tag = 'scoped memory for tpu_custom_call.1']
    #allocation4 [shape = 's32[1]{0}', space=sflag, size = 0x4, scoped, tag = 'scoped memory for tpu_custom_call.1']
    #allocation5 [shape = 'u8[4096]{0}', space=vmem, size = 0x1000, scoped, tag = 'output window, operand 0, single buffered']
    %12 = vsyncpa [#allocation3], 0
    %13 = vsyncpa [#allocation4], 0
    // Predicated region
    $region2: #{tpu_custom_call.1} parent=1 // pred_check
      _
    $region3: #{tpu_custom_call.1} parent=1 // pred_check_branch
      %15 = sbr.rel (0) target = $region5
    $region4: #{tpu_custom_call.1} parent=1 // pred_region
      _
    $region5: #{tpu_custom_call.1} parent=1 // pred_fallthru
      _
    // Predicated region
    $region6: #{tpu_custom_call.1} parent=1 // pred_check
      _
    $region7: #{tpu_custom_call.1} parent=1 // pred_check_branch
      %17 = sbr.rel (0) target = $region9
    $region8: #{tpu_custom_call.1} parent=1 // pred_region
      _
    $region9: #{tpu_custom_call.1} parent=1 // pred_fallthru
      _
    // Predicated region
    $region10: #{tpu_custom_call.1} parent=1 // pred_check
      _
    $region11: #{tpu_custom_call.1} parent=1 // pred_check_branch
      %19 = sbr.rel (0) target = $region13
    $region12: #{tpu_custom_call.1} parent=1 // pred_region
      _
    $region13: #{tpu_custom_call.1} parent=1 // pred_fallthru
      _
    // Predicated region
    $region14: #{tpu_custom_call.1} parent=1 // pred_check
      _
    $region15: #{tpu_custom_call.1} parent=1 // pred_check_branch
      %21 = sbr.rel (0) target = $region17
    $region16: #{tpu_custom_call.1} parent=1 // pred_region
      %s23 = ssub.s32 8192, 8192
      %24 = vsyncadd [#allocation3], %s23
      %s25 = sshll.u32 [#allocation2], 4
      %s26 = int_to_ptr.vmem [resolvable:$true] %s25
      %31 = dma.hbm_to_vmem [thread:$0]  %s3, 8192, %s26, [#allocation3], 256, 256, 16
    $region17: #{tpu_custom_call.1} parent=1 // pred_fallthru
      _
    // Predicated region
    $region18: #{tpu_custom_call.1} parent=1 // pred_check
      _
    $region19: #{tpu_custom_call.1} parent=1 // pred_check_branch
      %33 = sbr.rel (0) target = $region21
    $region20: #{tpu_custom_call.1} parent=1 // pred_region
      _
    $region21: #{tpu_custom_call.1} parent=1 // pred_fallthru
      _
    // Predicated region
    $region22: #{tpu_custom_call.1} parent=1 // pred_check
      _
    $region23: #{tpu_custom_call.1} parent=1 // pred_check_branch
      %35 = sbr.rel (0) target = $region25
    $region24: #{tpu_custom_call.1} parent=1 // pred_region
      _
    $region25: #{tpu_custom_call.1} parent=1 // pred_fallthru
      _
    // Predicated region
    $region26: #{tpu_custom_call.1} parent=1 // pred_check
      _
    $region27: #{tpu_custom_call.1} parent=1 // pred_check_branch
      %37 = sbr.rel (0) target = $region29
    $region28: #{tpu_custom_call.1} parent=1 // pred_region
      _
    $region29: #{tpu_custom_call.1} parent=1 // pred_fallthru
      _
    // Predicated region
    $region30: #{tpu_custom_call.1} parent=1 // pred_check
      _
    $region31: #{tpu_custom_call.1} parent=1 // pred_check_branch
      %39 = sbr.rel (0) target = $region33
    $region32: #{tpu_custom_call.1} parent=1 // pred_region
      %40 = dma.done [#allocation3], 8192
    $region33: #{tpu_custom_call.1} parent=1 // pred_fallthru
      _
    %v41 = vld [vmem:[%s0] sm:$0xff]
    %v42 = vld [vmem:[%s1] sm:$0xff]
    %v43 = vld [vmem:[%s1 + $0x8] sm:$0xff]
    %v44 = vld [vmem:[%s2] sm:$0x3]
    %v46 = vlaneseq
    %v47 = vshrl.u32 %v46, 7
    %v48 = vsub.s32 0, %v47
    %v49 = vrot.slane %v44, %v48
    %v50 = vlaneseq
    %v51 = vshrl.u32 %v50, 7
    %v52 = vsub.s32 1, %v51
    %v53 = vrot.slane %v44, %v52
    %vm56 = vcmask 64512
    %v58 = vsel %vm56, %v41, 0
    %60 = vmatprep.subr.mxu0 %v43
    %61 = vmatpush1.msra.mxu0 %v42
    %62 = vmatprep.subr.mxu0 0.0
    %63 = vmatpush1.msra.mxu0 0.0
    %64 = vmatprep.subr.mxu0 0.0
    %65 = vmatpush1.msra.mxu0 0.0
    %66 = vmatprep.subr.mxu0 0.0
    %67 = vmatpush1.msra.mxu0 0.0
    %68 = vmatprep.subr.mxu0 0.0
    %69 = vmatpush1.msra.mxu0 0.0
    %70 = vmatprep.subr.mxu0 0.0
    %71 = vmatpush1.msra.mxu0 0.0
    %72 = vmatprep.subr.mxu0 0.0
    %73 = vmatpush1.msra.mxu0 0.0
    %74 = vmatprep.subr.mxu0 0.0
    %75 = vmatpush1.msra.mxu0 0.0
    %76 = vmatprep.subr.mxu0 0.0
    %77 = vmatpush1.msra.mxu0 0.0
    %78 = vmatprep.subr.mxu0 0.0
    %79 = vmatpush1.msra.mxu0 0.0
    %80 = vmatprep.subr.mxu0 0.0
    %81 = vmatpush1.msra.mxu0 0.0
    %82 = vmatprep.subr.mxu0 0.0
    %83 = vmatpush1.msra.mxu0 0.0
    %84 = vmatprep.subr.mxu0 0.0
    %85 = vmatpush1.msra.mxu0 0.0
    %86 = vmatprep.subr.mxu0 0.0
    %87 = vmatpush1.msra.mxu0 0.0
    %88 = vmatprep.subr.mxu0 0.0
    %89 = vmatpush1.msra.mxu0 0.0
    %90 = vmatprep.subr.mxu0 0.0
    %91 = vmatpush1.msra.mxu0 0.0
    %92 = vmatprep.subr.mxu0 0.0
    %93 = vmatpush1.msra.mxu0 0.0
    %94 = vmatprep.subr.mxu0 0.0
    %95 = vmatpush1.msra.mxu0 0.0
    %96 = vmatprep.subr.mxu0 0.0
    %97 = vmatpush1.msra.mxu0 0.0
    %98 = vmatprep.subr.mxu0 0.0
    %99 = vmatpush1.msra.mxu0 0.0
    %100 = vmatprep.subr.mxu0 0.0
    %101 = vmatpush1.msra.mxu0 0.0
    %102 = vmatprep.subr.mxu0 0.0
    %103 = vmatpush1.msra.mxu0 0.0
    %104 = vmatprep.subr.mxu0 0.0
    %105 = vmatpush1.msra.mxu0 0.0
    %106 = vmatprep.subr.mxu0 0.0
    %107 = vmatpush1.msra.mxu0 0.0
    %108 = vmatprep.subr.mxu0 0.0
    %109 = vmatpush1.msra.mxu0 0.0
    %110 = vmatprep.subr.mxu0 0.0
    %111 = vmatpush1.msra.mxu0 0.0
    %112 = vmatprep.subr.mxu0 0.0
    %113 = vmatpush1.msra.mxu0 0.0
    %114 = vmatprep.subr.mxu0 0.0
    %115 = vmatpush1.msra.mxu0 0.0
    %116 = vmatprep.subr.mxu0 0.0
    %117 = vmatpush1.msra.mxu0 0.0
    %118 = vmatprep.subr.mxu0 0.0
    %119 = vmatpush1.msra.mxu0 0.0
    %120 = vmatprep.subr.mxu0 0.0
    %121 = vmatpush1.msra.mxu0 0.0
    %122 = vmatprep.subr.mxu0 0.0
    %123 = vmatpush1.msra.mxu0 0.0
    %124 = vmatprep.mubr.f32.mxu0 0.0
    %125 = vmatmul.mubr.f32.gmra.mrb[0].mxu0 %v58
    %v126 = vpop.f32.mrb[0].mxu0
    %v127 = vadd.f32 %v49, %v126
    %v128 = vpop.f32.mrb[0].mxu0
    %v129 = vadd.f32 %v53, %v128
    %130 = vdwg.mxu0
    %v131 = vmax.f32 %v127, 0.0
    %v132 = vmax.f32 %v129, 0.0
    %v133 = vld [vmem:[#allocation2] sm:$0xff]
    %v134 = vld [vmem:[#allocation2 + $0x8] sm:$0xff]
    %v135 = vld [vmem:[#allocation2 + $0x10] sm:$0xff]
    %v136 = vld [vmem:[#allocation2 + $0x18] sm:$0xff]
    %v137 = vld [vmem:[#allocation2 + $0x20] sm:$0xff]
    %v138 = vld [vmem:[#allocation2 + $0x28] sm:$0xff]
    %v139 = vld [vmem:[#allocation2 + $0x30] sm:$0xff]
    %v140 = vld [vmem:[#allocation2 + $0x38] sm:$0xff]
    %v141 = vld [vmem:[#allocation2 + $0x40] sm:$0xff]
    %v142 = vld [vmem:[#allocation2 + $0x48] sm:$0xff]
    %v143 = vld [vmem:[#allocation2 + $0x50] sm:$0xff]
    %v144 = vld [vmem:[#allocation2 + $0x58] sm:$0xff]
    %v145 = vld [vmem:[#allocation2 + $0x60] sm:$0xff]
    %v146 = vld [vmem:[#allocation2 + $0x68] sm:$0xff]
    %v147 = vld [vmem:[#allocation2 + $0x70] sm:$0xff]
    %v148 = vld [vmem:[#allocation2 + $0x78] sm:$0xff]
    %v149 = vld [vmem:[#allocation2 + $0x80] sm:$0xff]
    %v150 = vld [vmem:[#allocation2 + $0x88] sm:$0xff]
    %v151 = vld [vmem:[#allocation2 + $0x90] sm:$0xff]
    %v152 = vld [vmem:[#allocation2 + $0x98] sm:$0xff]
    %v153 = vld [vmem:[#allocation2 + $0xa0] sm:$0xff]
    %v154 = vld [vmem:[#allocation2 + $0xa8] sm:$0xff]
    %v155 = vld [vmem:[#allocation2 + $0xb0] sm:$0xff]
    %v156 = vld [vmem:[#allocation2 + $0xb8] sm:$0xff]
    %v157 = vld [vmem:[#allocation2 + $0xc0] sm:$0xff]
    %v158 = vld [vmem:[#allocation2 + $0xc8] sm:$0xff]
    %v159 = vld [vmem:[#allocation2 + $0xd0] sm:$0xff]
    %v160 = vld [vmem:[#allocation2 + $0xd8] sm:$0xff]
    %v161 = vld [vmem:[#allocation2 + $0xe0] sm:$0xff]
    %v162 = vld [vmem:[#allocation2 + $0xe8] sm:$0xff]
    %v163 = vld [vmem:[#allocation2 + $0xf0] sm:$0xff]
    %v164 = vld [vmem:[#allocation2 + $0xf8] sm:$0xff]
    %v165 = vld [vmem:[#allocation2 + $0x100] sm:$0xff]
    %v166 = vld [vmem:[#allocation2 + $0x108] sm:$0xff]
    %v167 = vld [vmem:[#allocation2 + $0x110] sm:$0xff]
    %v168 = vld [vmem:[#allocation2 + $0x118] sm:$0xff]
    %v169 = vld [vmem:[#allocation2 + $0x120] sm:$0xff]
    %v170 = vld [vmem:[#allocation2 + $0x128] sm:$0xff]
    %v171 = vld [vmem:[#allocation2 + $0x130] sm:$0xff]
    %v172 = vld [vmem:[#allocation2 + $0x138] sm:$0xff]
    %v173 = vld [vmem:[#allocation2 + $0x140] sm:$0xff]
    %v174 = vld [vmem:[#allocation2 + $0x148] sm:$0xff]
    %v175 = vld [vmem:[#allocation2 + $0x150] sm:$0xff]
    %v176 = vld [vmem:[#allocation2 + $0x158] sm:$0xff]
    %v177 = vld [vmem:[#allocation2 + $0x160] sm:$0xff]
    %v178 = vld [vmem:[#allocation2 + $0x168] sm:$0xff]
    %v179 = vld [vmem:[#allocation2 + $0x170] sm:$0xff]
    %v180 = vld [vmem:[#allocation2 + $0x178] sm:$0xff]
    %v181 = vld [vmem:[#allocation2 + $0x180] sm:$0xff]
    %v182 = vld [vmem:[#allocation2 + $0x188] sm:$0xff]
    %v183 = vld [vmem:[#allocation2 + $0x190] sm:$0xff]
    %v184 = vld [vmem:[#allocation2 + $0x198] sm:$0xff]
    %v185 = vld [vmem:[#allocation2 + $0x1a0] sm:$0xff]
    %v186 = vld [vmem:[#allocation2 + $0x1a8] sm:$0xff]
    %v187 = vld [vmem:[#allocation2 + $0x1b0] sm:$0xff]
    %v188 = vld [vmem:[#allocation2 + $0x1b8] sm:$0xff]
    %v189 = vld [vmem:[#allocation2 + $0x1c0] sm:$0xff]
    %v190 = vld [vmem:[#allocation2 + $0x1c8] sm:$0xff]
    %v191 = vld [vmem:[#allocation2 + $0x1d0] sm:$0xff]
    %v192 = vld [vmem:[#allocation2 + $0x1d8] sm:$0xff]
    %v193 = vld [vmem:[#allocation2 + $0x1e0] sm:$0xff]
    %v194 = vld [vmem:[#allocation2 + $0x1e8] sm:$0xff]
    %v195 = vld [vmem:[#allocation2 + $0x1f0] sm:$0xff]
    %v196 = vld [vmem:[#allocation2 + $0x1f8] sm:$0xff]
    %v197 = vld [vmem:[%s4] sm:$0x3]
    %v199 = vlaneseq
    %v200 = vshrl.u32 %v199, 7
    %v201 = vsub.s32 0, %v200
    %v202 = vrot.slane %v197, %v201
    %v203 = vlaneseq
    %v204 = vshrl.u32 %v203, 7
    %v205 = vsub.s32 1, %v204
    %v206 = vrot.slane %v197, %v205
    %209 = vmatprep.subr.mxu0 %v134
    %210 = vmatpush1.msra.mxu0 %v133
    %211 = vmatprep.subr.mxu0 %v136
    %212 = vmatpush1.msra.mxu0 %v135
    %213 = vmatprep.subr.mxu0 %v138
    %214 = vmatpush1.msra.mxu0 %v137
    %215 = vmatprep.subr.mxu0 %v140
    %216 = vmatpush1.msra.mxu0 %v139
    %217 = vmatprep.subr.mxu0 %v142
    %218 = vmatpush1.msra.mxu0 %v141
    %219 = vmatprep.subr.mxu0 %v144
    %220 = vmatpush1.msra.mxu0 %v143
    %221 = vmatprep.subr.mxu0 %v146
    %222 = vmatpush1.msra.mxu0 %v145
    %223 = vmatprep.subr.mxu0 %v148
    %224 = vmatpush1.msra.mxu0 %v147
    %225 = vmatprep.subr.mxu0 %v150
    %226 = vmatpush1.msra.mxu0 %v149
    %227 = vmatprep.subr.mxu0 %v152
    %228 = vmatpush1.msra.mxu0 %v151
    %229 = vmatprep.subr.mxu0 %v154
    %230 = vmatpush1.msra.mxu0 %v153
    %231 = vmatprep.subr.mxu0 %v156
    %232 = vmatpush1.msra.mxu0 %v155
    %233 = vmatprep.subr.mxu0 %v158
    %234 = vmatpush1.msra.mxu0 %v157
    %235 = vmatprep.subr.mxu0 %v160
    %236 = vmatpush1.msra.mxu0 %v159
    %237 = vmatprep.subr.mxu0 %v162
    %238 = vmatpush1.msra.mxu0 %v161
    %239 = vmatprep.subr.mxu0 %v164
    %240 = vmatpush1.msra.mxu0 %v163
    %241 = vmatprep.subr.mxu0 %v166
    %242 = vmatpush1.msra.mxu0 %v165
    %243 = vmatprep.subr.mxu0 %v168
    %244 = vmatpush1.msra.mxu0 %v167
    %245 = vmatprep.subr.mxu0 %v170
    %246 = vmatpush1.msra.mxu0 %v169
    %247 = vmatprep.subr.mxu0 %v172
    %248 = vmatpush1.msra.mxu0 %v171
    %249 = vmatprep.subr.mxu0 %v174
    %250 = vmatpush1.msra.mxu0 %v173
    %251 = vmatprep.subr.mxu0 %v176
    %252 = vmatpush1.msra.mxu0 %v175
    %253 = vmatprep.subr.mxu0 %v178
    %254 = vmatpush1.msra.mxu0 %v177
    %255 = vmatprep.subr.mxu0 %v180
    %256 = vmatpush1.msra.mxu0 %v179
    %257 = vmatprep.subr.mxu0 %v182
    %258 = vmatpush1.msra.mxu0 %v181
    %259 = vmatprep.subr.mxu0 %v184
    %260 = vmatpush1.msra.mxu0 %v183
    %261 = vmatprep.subr.mxu0 %v186
    %262 = vmatpush1.msra.mxu0 %v185
    %263 = vmatprep.subr.mxu0 %v188
    %264 = vmatpush1.msra.mxu0 %v187
    %265 = vmatprep.subr.mxu0 %v190
    %266 = vmatpush1.msra.mxu0 %v189
    %267 = vmatprep.subr.mxu0 %v192
    %268 = vmatpush1.msra.mxu0 %v191
    %269 = vmatprep.subr.mxu0 %v194
    %270 = vmatpush1.msra.mxu0 %v193
    %271 = vmatprep.subr.mxu0 %v196
    %272 = vmatpush1.msra.mxu0 %v195
    %273 = vmatprep.mubr.f32.mxu0 %v132
    %274 = vmatmul.mubr.f32.gmra.mrb[0].mxu0 %v131
    %v275 = vpop.f32.mrb[0].mxu0
    %v276 = vadd.f32 %v202, %v275
    %v277 = vpop.f32.mrb[0].mxu0
    %v278 = vadd.f32 %v206, %v277
    %279 = vdwg.mxu0
    %v280 = vmax.f32 %v276, 0.0
    %v281 = vmax.f32 %v278, 0.0
    %v282 = vld [vmem:[%s5] sm:$0xff]
    %v283 = vld [vmem:[%s5 + $0x8] sm:$0xff]
    %v284 = vld [vmem:[%s5 + $0x10] sm:$0xff]
    %v285 = vld [vmem:[%s5 + $0x18] sm:$0xff]
    %v286 = vld [vmem:[%s5 + $0x20] sm:$0xff]
    %v287 = vld [vmem:[%s5 + $0x28] sm:$0xff]
    %v288 = vld [vmem:[%s5 + $0x30] sm:$0xff]
    %v289 = vld [vmem:[%s5 + $0x38] sm:$0xff]
    %v290 = vld [vmem:[%s5 + $0x40] sm:$0xff]
    %v291 = vld [vmem:[%s5 + $0x48] sm:$0xff]
    %v292 = vld [vmem:[%s5 + $0x50] sm:$0xff]
    %v293 = vld [vmem:[%s5 + $0x58] sm:$0xff]
    %v294 = vld [vmem:[%s5 + $0x60] sm:$0xff]
    %v295 = vld [vmem:[%s5 + $0x68] sm:$0xff]
    %v296 = vld [vmem:[%s5 + $0x70] sm:$0xff]
    %v297 = vld [vmem:[%s5 + $0x78] sm:$0xff]
    %v298 = vld [vmem:[%s5 + $0x80] sm:$0xff]
    %v299 = vld [vmem:[%s5 + $0x88] sm:$0xff]
    %v300 = vld [vmem:[%s5 + $0x90] sm:$0xff]
    %v301 = vld [vmem:[%s5 + $0x98] sm:$0xff]
    %v302 = vld [vmem:[%s5 + $0xa0] sm:$0xff]
    %v303 = vld [vmem:[%s5 + $0xa8] sm:$0xff]
    %v304 = vld [vmem:[%s5 + $0xb0] sm:$0xff]
    %v305 = vld [vmem:[%s5 + $0xb8] sm:$0xff]
    %v306 = vld [vmem:[%s5 + $0xc0] sm:$0xff]
    %v307 = vld [vmem:[%s5 + $0xc8] sm:$0xff]
    %v308 = vld [vmem:[%s5 + $0xd0] sm:$0xff]
    %v309 = vld [vmem:[%s5 + $0xd8] sm:$0xff]
    %v310 = vld [vmem:[%s5 + $0xe0] sm:$0xff]
    %v311 = vld [vmem:[%s5 + $0xe8] sm:$0xff]
    %v312 = vld [vmem:[%s5 + $0xf0] sm:$0xff]
    %v313 = vld [vmem:[%s5 + $0xf8] sm:$0xff]
    %v314 = vld [vmem:[%s6] sm:$0x1]
    %v316 = vlaneseq
    %v317 = vshrl.u32 %v316, 7
    %v318 = vsub.s32 0, %v317
    %v319 = vrot.slane %v314, %v318
    %321 = vmatprep.subr.mxu0 0.0
    %322 = vmatpush1.msra.mxu0 %v282
    %323 = vmatprep.subr.mxu0 0.0
    %324 = vmatpush1.msra.mxu0 %v283
    %325 = vmatprep.subr.mxu0 0.0
    %326 = vmatpush1.msra.mxu0 %v284
    %327 = vmatprep.subr.mxu0 0.0
    %328 = vmatpush1.msra.mxu0 %v285
    %329 = vmatprep.subr.mxu0 0.0
    %330 = vmatpush1.msra.mxu0 %v286
    %331 = vmatprep.subr.mxu0 0.0
    %332 = vmatpush1.msra.mxu0 %v287
    %333 = vmatprep.subr.mxu0 0.0
    %334 = vmatpush1.msra.mxu0 %v288
    %335 = vmatprep.subr.mxu0 0.0
    %336 = vmatpush1.msra.mxu0 %v289
    %337 = vmatprep.subr.mxu0 0.0
    %338 = vmatpush1.msra.mxu0 %v290
    %339 = vmatprep.subr.mxu0 0.0
    %340 = vmatpush1.msra.mxu0 %v291
    %341 = vmatprep.subr.mxu0 0.0
    %342 = vmatpush1.msra.mxu0 %v292
    %343 = vmatprep.subr.mxu0 0.0
    %344 = vmatpush1.msra.mxu0 %v293
    %345 = vmatprep.subr.mxu0 0.0
    %346 = vmatpush1.msra.mxu0 %v294
    %347 = vmatprep.subr.mxu0 0.0
    %348 = vmatpush1.msra.mxu0 %v295
    %349 = vmatprep.subr.mxu0 0.0
    %350 = vmatpush1.msra.mxu0 %v296
    %351 = vmatprep.subr.mxu0 0.0
    %352 = vmatpush1.msra.mxu0 %v297
    %353 = vmatprep.subr.mxu0 0.0
    %354 = vmatpush1.msra.mxu0 %v298
    %355 = vmatprep.subr.mxu0 0.0
    %356 = vmatpush1.msra.mxu0 %v299
    %357 = vmatprep.subr.mxu0 0.0
    %358 = vmatpush1.msra.mxu0 %v300
    %359 = vmatprep.subr.mxu0 0.0
    %360 = vmatpush1.msra.mxu0 %v301
    %361 = vmatprep.subr.mxu0 0.0
    %362 = vmatpush1.msra.mxu0 %v302
    %363 = vmatprep.subr.mxu0 0.0
    %364 = vmatpush1.msra.mxu0 %v303
    %365 = vmatprep.subr.mxu0 0.0
    %366 = vmatpush1.msra.mxu0 %v304
    %367 = vmatprep.subr.mxu0 0.0
    %368 = vmatpush1.msra.mxu0 %v305
    %369 = vmatprep.subr.mxu0 0.0
    %370 = vmatpush1.msra.mxu0 %v306
    %371 = vmatprep.subr.mxu0 0.0
    %372 = vmatpush1.msra.mxu0 %v307
    %373 = vmatprep.subr.mxu0 0.0
    %374 = vmatpush1.msra.mxu0 %v308
    %375 = vmatprep.subr.mxu0 0.0
    %376 = vmatpush1.msra.mxu0 %v309
    %377 = vmatprep.subr.mxu0 0.0
    %378 = vmatpush1.msra.mxu0 %v310
    %379 = vmatprep.subr.mxu0 0.0
    %380 = vmatpush1.msra.mxu0 %v311
    %381 = vmatprep.subr.mxu0 0.0
    %382 = vmatpush1.msra.mxu0 %v312
    %383 = vmatprep.subr.mxu0 0.0
    %384 = vmatpush1.msra.mxu0 %v313
    %385 = vmatprep.mubr.f32.mxu0 %v281
    %386 = vmatmul.mubr.f32.gmra.mrb[0].mxu0 %v280
    %v387 = vpop.f32.mrb[0].mxu0
    %v388 = vadd.f32 %v319, %v387
    %v389 = vpop.f32.mrb[0].mxu0
    %390 = vdwg.mxu0
    %v391 = vlaneseq
    %v392 = vand.u32 %v391, 127
    %v393 = vmax.f32 %v388, 0.0
    %v394 = vmin.f32 %v393, 2.0
    %vm395 = vcmp.ge.s32.totalorder %v392, 4
    %v396 = vsel %vm395, %v394, %v388
    %397 = vst.msk [vmem:[#allocation5] sm:$0xff] %vm56, %v396
    // Predicated region
    $region34: #{tpu_custom_call.1} parent=1 // pred_check
      _
    $region35: #{tpu_custom_call.1} parent=1 // pred_check_branch
      %399 = sbr.rel (0) target = $region37
    $region36: #{tpu_custom_call.1} parent=1 // pred_region
      %s401 = ssub.s32 128, 128
      %402 = vsyncadd [#allocation4], %s401
      %s404 = sshll.u32 [#allocation5], 4
      %s405 = int_to_ptr.vmem [resolvable:$true] %s404
      %407 = dma.vmem_to_hbm [thread:$0]  %s405, 128, %s7, [#allocation4]
    $region37: #{tpu_custom_call.1} parent=1 // pred_fallthru
      _
    // Predicated region
    $region38: #{tpu_custom_call.1} parent=1 // pred_check
      _
    $region39: #{tpu_custom_call.1} parent=1 // pred_check_branch
      %409 = sbr.rel (0) target = $region41
    $region40: #{tpu_custom_call.1} parent=1 // pred_region
      %410 = dma.done [#allocation4], 128
    $region41: #{tpu_custom_call.1} parent=1 // pred_fallthru
      _
    %411 = vsyncpa [#allocation3], 1
    %412 = vsyncpa [#allocation4], 1

</llo_original>
